<compile_context>
chip_gen: v5e
topology: v5e:2x2
jax: 0.10.0
libtpu: 0.0.40
codegen_flags: <defaults>
</compile_context>

<pallas_src>
import functools
import numpy as np
import jax
import jax.numpy as jnp
from jax.experimental import pallas as pl
from jax.experimental.pallas import tpu as pltpu


LANES = 128
BN_EPS = 1e-5


def _round_up(n, m):
    return ((n + m - 1) // m) * m


def _pad2(a, shape):
    """Zero-pad a 2-D array up to `shape` (rows/cols appended)."""
    return jnp.pad(a, ((0, shape[0] - a.shape[0]), (0, shape[1] - a.shape[1])))


def _joint_kstonet_kernel(n_mlp, act_dtype, bias_slices, *refs):
    """Forward pass on one (tb, input_dim_p) batch tile; all params VMEM-resident.

    refs order:
      x, random_weights, bias_cat,
      w1,                          # fused RFF-scale + projection + SV linear
      w_i * n_mlp,                 # Linear with eval-BatchNorm folded in
      w_out, out_ref
    bias_cat holds [random_offset | b1 | mlp biases ... | b_out] lane-concatenated
    (all segments 128-aligned); bias_slices are static (offset, width) pairs.
    """
    it = iter(refs)
    x_ref = next(it)
    rw_ref = next(it)
    bias_ref = next(it)
    w1_ref = next(it)
    wl_refs = [next(it) for _ in range(n_mlp)]
    wout_ref = next(it)
    out_ref = next(it)

    def bias(i):
        off, width = bias_slices[i]
        return bias_ref[:, off:off + width]          # static, lane-aligned slice

    # --- DifferentiableKernel: Random Fourier Features (kept f32: cos is
    #     phase-sensitive over the K=input_dim accumulation) ---
    proj = jnp.dot(x_ref[...], rw_ref[...], preferred_element_type=jnp.float32)
    feat = jnp.cos(proj + bias(0)).astype(act_dtype)  # RFF scale folded into w1

    # --- fused projection + support-vector linear ---
    h = jnp.dot(feat, w1_ref[...], preferred_element_type=jnp.float32)
    h = jnp.tanh((h + bias(1)).astype(act_dtype))     # tanh in bf16 on v6e/v7x

    # --- MLP trunk: Linear (BN folded) -> tanh; dropout identity in eval ---
    for li, w_r in enumerate(wl_refs):
        h = jnp.dot(h, w_r[...], preferred_element_type=jnp.float32)
        h = jnp.tanh((h + bias(2 + li)).astype(act_dtype))

    # --- output layer ---
    out = jnp.dot(h, wout_ref[...], preferred_element_type=jnp.float32)
    out_ref[...] = (out + bias(2 + n_mlp)).astype(out_ref.dtype)


def joint_kstonet_forward(x, params, *, block_b=512, matmul_dtype=jnp.bfloat16,
                          rff_dtype=jnp.float32):
    """Flatten input, fuse/pad params (one-time XLA ops), launch batch-tiled kernel.

    matmul_dtype: trunk weight/activation dtype. bf16 default for MXU peak and
      half the weight DMA / VMEM on v6e/v7x; accumulation stays f32.
    rff_dtype:    dtype of x / random_weights. Kept f32 by default — the cos()
      argument accumulates rounding over K = input_dim.
    """
    B = x.shape[0]
    x2 = x.reshape(B, -1).astype(jnp.float32)
    input_dim = x2.shape[1]
    n_components = params["random_weights"].shape[1]
    out_dim = params["w_out"].shape[1]

    # ---- padded dims: every feature axis (incl. the RFF K) lane-dense ----
    in_p = _round_up(input_dim, LANES)
    nc_p = _round_up(n_components, LANES)
    hdims = [params["w_proj"].shape[1]] + [lp["w"].shape[1] for lp in params["mlp"]]
    hdims_p = [_round_up(d, LANES) for d in hdims]
    out_p = _round_up(out_dim, LANES)

    # ---- wrapper-side algebraic fusion ----
    rff_scale = np.float32(np.sqrt(2.0 / n_components))
    rw = _pad2(params["random_weights"], (in_p, nc_p)).astype(rff_dtype)
    w1 = _pad2((params["w_proj"] + params["sv_w"]) * rff_scale,
               (nc_p, hdims_p[0])).astype(matmul_dtype)

    bias_list = [_pad2(params["random_offset"], (1, nc_p)),
                 _pad2(params["b_proj"] + params["sv_b"], (1, hdims_p[0]))]
    layer_ws = []
    for i, lp in enumerate(params["mlp"]):
        s = lp["gamma"] * jax.lax.rsqrt(lp["var"] + BN_EPS)        # eval-mode BN fold
        layer_ws.append(_pad2(lp["w"] * s,
                              (hdims_p[i], hdims_p[i + 1])).astype(matmul_dtype))
        bias_list.append(_pad2((lp["b"] - lp["mean"]) * s + lp["beta"],
                               (1, hdims_p[i + 1])))
    w_out = _pad2(params["w_out"], (hdims_p[-1], out_p)).astype(matmul_dtype)
    bias_list.append(_pad2(params["b_out"], (1, out_p)))

    bias_slices, off = [], 0
    for bvec in bias_list:
        bias_slices.append((off, bvec.shape[1]))
        off += bvec.shape[1]
    bias_cat = jnp.concatenate([b.astype(jnp.float32) for b in bias_list], axis=1)

    # ---- batch tiling: dtype-aware sublane packing; keep >=2 grid steps when
    #      the batch allows so both v7x TensorCores get work ----
    sub = {4: 8, 2: 16, 1: 32}[jnp.dtype(matmul_dtype).itemsize]
    tb = _round_up(min(block_b, _round_up(B, sub)), sub)
    Bp = _round_up(B, tb)
    if Bp // tb < 2 and _round_up(B, sub) >= 2 * sub:
        tb = _round_up(-(-B // 2), sub)          # ceil(B/2), sublane-rounded
        Bp = _round_up(B, tb)
    x_pad = jnp.pad(x2, ((0, Bp - B), (0, in_p - input_dim))).astype(rff_dtype)

    param_arrays = [rw, bias_cat, w1, *layer_ws, w_out]
    n_mlp = len(layer_ws)
    kernel = functools.partial(_joint_kstonet_kernel, n_mlp,
                               jnp.dtype(matmul_dtype), tuple(bias_slices))

    # ---- VMEM budget: params (x2 worst case if double-buffered) + x/out tiles ----
    param_bytes = sum(int(a.size) * a.dtype.itemsize for a in param_arrays)
    io_bytes = (3 * tb * in_p * jnp.dtype(rff_dtype).itemsize + 2 * tb * out_p * 4)
    vmem_limit = int(min(110 << 20,
                         max(32 << 20, 2 * param_bytes + io_bytes + (4 << 20))))

    def build_specs(single_buffer_params):
        if single_buffer_params:
            # Params have a constant block index -> single-buffer them (halves
            # their resident footprint; matters on v7x's 64 MiB VMEM). Deeper
            # buffering on x hides HBM latency behind the short per-tile compute.
            x_spec = pl.BlockSpec((tb, in_p), lambda i: (i, 0),
                                  pipeline_mode=pl.Buffered(3))
            p_specs = [pl.BlockSpec(a.shape, lambda i: (0, 0),
                                    pipeline_mode=pl.Buffered(1))
                       for a in param_arrays]
        else:
            x_spec = pl.BlockSpec((tb, in_p), lambda i: (i, 0))
            p_specs = [pl.BlockSpec(a.shape, lambda i: (0, 0)) for a in param_arrays]
        return [x_spec] + p_specs

    out_spec = pl.BlockSpec((tb, out_p), lambda i: (i, 0))

    last_err = None
    # Try the VMEM-disciplined spec first; fall back to plain BlockSpecs if
    # pipeline_mode is not supported by the installed jax/pallas version.
    for single_buf in (True, False):
        try:
            out_padded = pl.pallas_call(
                kernel,
                out_shape=jax.ShapeDtypeStruct((Bp, out_p), jnp.float32),
                grid=(Bp // tb,),
                in_specs=build_specs(single_buf),
                out_specs=out_spec,
                compiler_params=pltpu.CompilerParams(
                    dimension_semantics=("parallel",),   # megacore sharding on v7x
                    vmem_limit_bytes=vmem_limit),
            )(x_pad, *param_arrays)
            out_padded = jax.block_until_ready(out_padded)
            return out_padded[:B, :out_dim]
        except Exception as e:  # noqa: BLE001 - fall back once, then re-raise
            last_err = e
    raise last_err


def init_params(key, input_dim, hidden_dims, output_dim, gamma=0.1, n_components=128):
    """Deterministic parameter init mirroring JointKStoNet.__init__ shapes."""
    ks = jax.random.split(key, 8 + 2 * len(hidden_dims))
    ki = iter(ks)

    params = {}
    params["random_weights"] = (jax.random.normal(next(ki), (input_dim, n_components),
                                                  jnp.float32)
                                * np.float32(np.sqrt(2.0 * gamma)))
    params["random_offset"] = (jax.random.uniform(next(ki), (1, n_components),
                                                  jnp.float32)
                               * np.float32(2.0 * np.pi))
    h0 = hidden_dims[0]
    lim = 1.0 / np.sqrt(n_components)
    params["w_proj"] = jax.random.uniform(next(ki), (n_components, h0), jnp.float32,
                                          -lim, lim)
    params["b_proj"] = jax.random.uniform(next(ki), (1, h0), jnp.float32, -lim, lim)
    params["sv_w"] = jnp.zeros((n_components, h0), jnp.float32)
    params["sv_b"] = jnp.zeros((1, h0), jnp.float32)

    mlp = []
    for i in range(len(hidden_dims) - 1):
        fan_in = hidden_dims[i]
        fan_out = hidden_dims[i + 1]
        lim = 1.0 / np.sqrt(fan_in)
        w = jax.random.uniform(next(ki), (fan_in, fan_out), jnp.float32, -lim, lim)
        b = jax.random.uniform(next(ki), (1, fan_out), jnp.float32, -lim, lim)
        mlp.append({
            "w": w, "b": b,
            "gamma": jnp.ones((1, fan_out), jnp.float32),
            "beta": jnp.zeros((1, fan_out), jnp.float32),
            "mean": jnp.zeros((1, fan_out), jnp.float32),
            "var": jnp.ones((1, fan_out), jnp.float32),
        })
    params["mlp"] = mlp

    fan_in = hidden_dims[-1]
    lim = 1.0 / np.sqrt(fan_in)
    params["w_out"] = jax.random.uniform(next(ki), (fan_in, output_dim), jnp.float32,
                                         -lim, lim)
    params["b_out"] = jax.random.uniform(next(ki), (1, output_dim), jnp.float32,
                                         -lim, lim)
    return params


def _reference_forward(x, params):
    """Pure-JAX reference mirroring the *unfused* PyTorch forward (eval mode)."""
    B = x.shape[0]
    h = x.reshape(B, -1).astype(jnp.float32)
    n_components = params["random_weights"].shape[1]
    proj = h @ params["random_weights"] + params["random_offset"]
    feat = jnp.cos(proj) * np.float32(np.sqrt(2.0 / n_components))
    h = (feat @ params["w_proj"] + params["b_proj"]
         + feat @ params["sv_w"] + params["sv_b"])
    h = jnp.tanh(h)
    for lp in params["mlp"]:
        h = h @ lp["w"] + lp["b"]
        h = (h - lp["mean"]) / jnp.sqrt(lp["var"] + BN_EPS) * lp["gamma"] + lp["beta"]
        h = jnp.tanh(h)
    return h @ params["w_out"] + params["b_out"]


if __name__ == "__main__":
    key = jax.random.PRNGKey(0)
    k_x, k_p, k_x2 = jax.random.split(key, 3)

    # Small shapes consistent with the module: image-like input flattened to 1024.
    B, C, H, W = 2, 4, 16, 16
    input_dim = C * H * W
    hidden_dims = [32, 32]
    output_dim = 8
    n_components = 128

    x = jax.random.normal(k_x, (B, C, H, W), jnp.float32)
    params = init_params(k_p, input_dim, hidden_dims, output_dim,
                         gamma=0.1, n_components=n_components)

    # --- exact-dtype path: f32 matmuls, tight numerical check vs. reference ---
    out = joint_kstonet_forward(x, params, matmul_dtype=jnp.float32)
    out = jax.block_until_ready(out)
    ref = _reference_forward(x, params)
    np_out, np_ref = np.asarray(out), np.asarray(ref)
    assert np_out.shape == (B, output_dim)
    assert np.allclose(np_out, np_ref, rtol=1e-4, atol=1e-4), \
        f"f32 max abs err = {np.max(np.abs(np_out - np_ref))}"

    # --- default bf16 trunk + multi-step grid (exercises v7x megacore path) ---
    B2 = 48
    x_big = jax.random.normal(k_x2, (B2, C, H, W), jnp.float32)
    ref_big = np.asarray(_reference_forward(x_big, params))
    out_big = np.asarray(jax.block_until_ready(joint_kstonet_forward(x_big, params)))
    assert out_big.shape == (B2, output_dim)
    err = float(np.max(np.abs(out_big - ref_big)))
    assert np.isfinite(out_big).all() and err < 0.1, f"bf16 max abs err = {err}"

    print("KERNEL_OK")
</pallas_src>

<mosaic_0001>
module attributes {stable_mosaic.version = 11 : i64} {
  func.func @_joint_kstonet_kernel(%arg0: i32, %arg1: memref<8x1024xf32, #tpu.memory_space<vmem>>, %arg2: memref<1024x128xf32, #tpu.memory_space<vmem>>, %arg3: memref<1x512xf32, #tpu.memory_space<vmem>>, %arg4: memref<128x128xf32, #tpu.memory_space<vmem>>, %arg5: memref<128x128xf32, #tpu.memory_space<vmem>>, %arg6: memref<128x128xf32, #tpu.memory_space<vmem>>, %arg7: memref<8x128xf32, #tpu.memory_space<vmem>>) attributes {dimension_semantics = [#tpu.dimension_semantics<parallel>], iteration_bounds = array<i64: 1>, scalar_prefetch = 0 : i64, scratch_operands = 0 : i64, tpu.core_type = #tpu.core_type<tc>, window_params = [{transform_indices = @transform_0, window_bounds = array<i64: 8, 1024>}, {pipeline_mode = #tpu.pipeline_mode<synchronous>, transform_indices = @transform_1, window_bounds = array<i64: 1024, 128>}, {pipeline_mode = #tpu.pipeline_mode<synchronous>, transform_indices = @transform_2, window_bounds = array<i64: 1, 512>}, {pipeline_mode = #tpu.pipeline_mode<synchronous>, transform_indices = @transform_3, window_bounds = array<i64: 128, 128>}, {pipeline_mode = #tpu.pipeline_mode<synchronous>, transform_indices = @transform_4, window_bounds = array<i64: 128, 128>}, {pipeline_mode = #tpu.pipeline_mode<synchronous>, transform_indices = @transform_5, window_bounds = array<i64: 128, 128>}, {transform_indices = @transform_6, window_bounds = array<i64: 8, 128>}]} {
    %c0 = arith.constant 0 : index
    %c0_0 = arith.constant 0 : index
    %0 = vector.load %arg1[%c0, %c0_0] : memref<8x1024xf32, #tpu.memory_space<vmem>>, vector<8x1024xf32>
    %c0_1 = arith.constant 0 : index
    %c0_2 = arith.constant 0 : index
    %1 = vector.load %arg2[%c0_1, %c0_2] : memref<1024x128xf32, #tpu.memory_space<vmem>>, vector<1024x128xf32>
    %cst = arith.constant dense<0.000000e+00> : vector<8x128xf32>
    %2 = tpu.matmul %0, %1, %cst {dimension_numbers = #tpu.dot_dimension_numbers<[1], [0], [0], [1], [0, 0, 1, 1], [], []>} : vector<8x1024xf32>, vector<1024x128xf32>, vector<8x128xf32> -> vector<8x128xf32>
    %c0_3 = arith.constant 0 : index
    %c0_4 = arith.constant 0 : index
    %3 = vector.load %arg3[%c0_3, %c0_4] : memref<1x512xf32, #tpu.memory_space<vmem>>, vector<1x128xf32>
    %4 = vector.broadcast %3 : vector<1x128xf32> to vector<8x128xf32>
    %5 = arith.addf %2, %4 : vector<8x128xf32>
    %6 = math.cos %5 : vector<8x128xf32>
    %c0_5 = arith.constant 0 : index
    %c0_6 = arith.constant 0 : index
    %7 = vector.load %arg4[%c0_5, %c0_6] : memref<128x128xf32, #tpu.memory_space<vmem>>, vector<128x128xf32>
    %cst_7 = arith.constant dense<0.000000e+00> : vector<8x128xf32>
    %8 = tpu.matmul %6, %7, %cst_7 {dimension_numbers = #tpu.dot_dimension_numbers<[1], [0], [0], [1], [0, 0, 1, 1], [], []>} : vector<8x128xf32>, vector<128x128xf32>, vector<8x128xf32> -> vector<8x128xf32>
    %c0_8 = arith.constant 0 : index
    %c128 = arith.constant 128 : index
    %9 = vector.load %arg3[%c0_8, %c128] : memref<1x512xf32, #tpu.memory_space<vmem>>, vector<1x128xf32>
    %10 = vector.broadcast %9 : vector<1x128xf32> to vector<8x128xf32>
    %11 = arith.addf %8, %10 : vector<8x128xf32>
    %12 = math.tanh %11 : vector<8x128xf32>
    %c0_9 = arith.constant 0 : index
    %c0_10 = arith.constant 0 : index
    %13 = vector.load %arg5[%c0_9, %c0_10] : memref<128x128xf32, #tpu.memory_space<vmem>>, vector<128x128xf32>
    %cst_11 = arith.constant dense<0.000000e+00> : vector<8x128xf32>
    %14 = tpu.matmul %12, %13, %cst_11 {dimension_numbers = #tpu.dot_dimension_numbers<[1], [0], [0], [1], [0, 0, 1, 1], [], []>} : vector<8x128xf32>, vector<128x128xf32>, vector<8x128xf32> -> vector<8x128xf32>
    %c0_12 = arith.constant 0 : index
    %c256 = arith.constant 256 : index
    %15 = vector.load %arg3[%c0_12, %c256] : memref<1x512xf32, #tpu.memory_space<vmem>>, vector<1x128xf32>
    %16 = vector.broadcast %15 : vector<1x128xf32> to vector<8x128xf32>
    %17 = arith.addf %14, %16 : vector<8x128xf32>
    %18 = math.tanh %17 : vector<8x128xf32>
    %c0_13 = arith.constant 0 : index
    %c0_14 = arith.constant 0 : index
    %19 = vector.load %arg6[%c0_13, %c0_14] : memref<128x128xf32, #tpu.memory_space<vmem>>, vector<128x128xf32>
    %cst_15 = arith.constant dense<0.000000e+00> : vector<8x128xf32>
    %20 = tpu.matmul %18, %19, %cst_15 {dimension_numbers = #tpu.dot_dimension_numbers<[1], [0], [0], [1], [0, 0, 1, 1], [], []>} : vector<8x128xf32>, vector<128x128xf32>, vector<8x128xf32> -> vector<8x128xf32>
    %c0_16 = arith.constant 0 : index
    %c384 = arith.constant 384 : index
    %21 = vector.load %arg3[%c0_16, %c384] : memref<1x512xf32, #tpu.memory_space<vmem>>, vector<1x128xf32>
    %22 = vector.broadcast %21 : vector<1x128xf32> to vector<8x128xf32>
    %23 = arith.addf %20, %22 : vector<8x128xf32>
    %c0_17 = arith.constant 0 : index
    %c0_18 = arith.constant 0 : index
    %24 = vector.load %arg7[%c0_17, %c0_18] : memref<8x128xf32, #tpu.memory_space<vmem>>, vector<8x128xf32>
    tpu.vector_store %arg7[%c0_17, %c0_18], %23 {strides = array<i32>} : memref<8x128xf32, #tpu.memory_space<vmem>>, vector<8x128xf32>,
    return
  }
  func.func @transform_0(%arg0: i32) -> (i32, i32) {
    %c0_i32 = arith.constant 0 : i32
    %c0_i32_0 = arith.constant 0 : i32
    return %arg0, %c0_i32 : i32, i32
  }
  func.func @transform_1(%arg0: i32) -> (i32, i32) {
    %c0_i32 = arith.constant 0 : i32
    %c0_i32_0 = arith.constant 0 : i32
    %c0_i32_1 = arith.constant 0 : i32
    return %c0_i32, %c0_i32_0 : i32, i32
  }
  func.func @transform_2(%arg0: i32) -> (i32, i32) {
    %c0_i32 = arith.constant 0 : i32
    %c0_i32_0 = arith.constant 0 : i32
    %c0_i32_1 = arith.constant 0 : i32
    return %c0_i32, %c0_i32_0 : i32, i32
  }
  func.func @transform_3(%arg0: i32) -> (i32, i32) {
    %c0_i32 = arith.constant 0 : i32
    %c0_i32_0 = arith.constant 0 : i32
    %c0_i32_1 = arith.constant 0 : i32
    return %c0_i32, %c0_i32_0 : i32, i32
  }
  func.func @transform_4(%arg0: i32) -> (i32, i32) {
    %c0_i32 = arith.constant 0 : i32
    %c0_i32_0 = arith.constant 0 : i32
    %c0_i32_1 = arith.constant 0 : i32
    return %c0_i32, %c0_i32_0 : i32, i32
  }
  func.func @transform_5(%arg0: i32) -> (i32, i32) {
    %c0_i32 = arith.constant 0 : i32
    %c0_i32_0 = arith.constant 0 : i32
    %c0_i32_1 = arith.constant 0 : i32
    return %c0_i32, %c0_i32_0 : i32, i32
  }
  func.func @transform_6(%arg0: i32) -> (i32, i32) {
    %c0_i32 = arith.constant 0 : i32
    %c0_i32_0 = arith.constant 0 : i32
    return %arg0, %c0_i32 : i32, i32
  }
}

</mosaic_0001>

<llo_original>
// kernel: tpu_custom_call.1
$region0: #{tpu_custom_call.1}
  #allocation0 [shape = 'u32[]', space=smem, size = 0x4, offset = 0x4, fixed_abs, tag = 'smem constant byte address 0x4 - core index']
  #allocation1 [shape = 'u32[72,128]{1,0:T(1,128)}', space=vmem, size = 0x9000, scoped, tag = 'internal scratch']
  %s0 = inlined_call_operand.hbm [shape: f32[8,1024], index: 0, kind: input, shape index: {}]
  %s1 = inlined_call_operand.hbm [shape: f32[1024,128], index: 1, kind: input, shape index: {}]
  %s2 = inlined_call_operand.hbm [shape: f32[1,512], index: 2, kind: input, shape index: {}]
  %s3 = inlined_call_operand.hbm [shape: f32[128,128], index: 3, kind: input, shape index: {}]
  %s4 = inlined_call_operand.hbm [shape: f32[128,128], index: 4, kind: input, shape index: {}]
  %s5 = inlined_call_operand.hbm [shape: f32[128,128], index: 5, kind: input, shape index: {}]
  %s6 = inlined_call_operand.hbm [shape: f32[8,128], index: 6, kind: output, shape index: {}]
  %s7 = sld [smem:[#allocation0]]
  $region58: #{tpu_custom_call.1} parent=0
    _
  %s9 = ssub.s32 1, %s7
  %s10 = scalar_select 0, %s9, %s7
  $region1: #{tpu_custom_call.1} parent=0
    #allocation2 [shape = 'u8[32768]{0}', space=vmem, size = 0x8000, scoped, tag = 'input window, operand 0, single buffered']
    #allocation3 [shape = 's32[1]{0}', space=sflag, size = 0x4, scoped, tag = 'scoped memory for tpu_custom_call.1']
    #allocation4 [shape = 's32[1]{0}', space=sflag, size = 0x4, scoped, tag = 'scoped memory for tpu_custom_call.1']
    #allocation5 [shape = 'u8[524288]{0}', space=vmem, size = 0x80000, scoped, tag = 'input window, operand 1, single buffered']
    #allocation6 [shape = 's32[1]{0}', space=sflag, size = 0x4, scoped, tag = 'scoped memory for tpu_custom_call.1']
    #allocation7 [shape = 'u8[2048]{0}', space=vmem, size = 0x800, scoped, tag = 'input window, operand 2, single buffered']
    #allocation8 [shape = 'u8[65536]{0}', space=vmem, size = 0x10000, scoped, tag = 'input window, operand 3, single buffered']
    #allocation9 [shape = 's32[1]{0}', space=sflag, size = 0x4, scoped, tag = 'scoped memory for tpu_custom_call.1']
    #allocation10 [shape = 'u8[65536]{0}', space=vmem, size = 0x10000, scoped, tag = 'input window, operand 4, single buffered']
    #allocation11 [shape = 'u8[65536]{0}', space=vmem, size = 0x10000, scoped, tag = 'input window, operand 5, single buffered']
    #allocation12 [shape = 's32[1]{0}', space=sflag, size = 0x4, scoped, tag = 'scoped memory for tpu_custom_call.1']
    #allocation13 [shape = 'u8[4096]{0}', space=vmem, size = 0x1000, scoped, tag = 'output window, operand 0, single buffered']
    %11 = vsyncpa [#allocation3], 0
    %12 = vsyncpa [#allocation6], 0
    %13 = vsyncpa [#allocation9], 0
    %14 = vsyncpa [#allocation12], 0
    %15 = vsyncpa [#allocation4], 0
    // Predicated region
    $region2: #{tpu_custom_call.1} parent=1 // pred_check
      _
    $region3: #{tpu_custom_call.1} parent=1 // pred_check_branch
      %17 = sbr.rel (0) target = $region5
    $region4: #{tpu_custom_call.1} parent=1 // pred_region
      %19 = vsyncadd [#allocation3], 0
      %s21 = sshll.u32 %s0, 4
      %s22 = int_to_ptr.hbm [resolvable:$true] %s21
      %s23 = sshll.u32 [#allocation2], 4
      %s24 = int_to_ptr.vmem [resolvable:$true] %s23
      %26 = dma.hbm_to_vmem [thread:$0]  %s22, 1024, %s24, [#allocation3]
    $region5: #{tpu_custom_call.1} parent=1 // pred_fallthru
      _
    // Predicated region
    $region6: #{tpu_custom_call.1} parent=1 // pred_check
      _
    $region7: #{tpu_custom_call.1} parent=1 // pred_check_branch
      %28 = sbr.rel (0) target = $region9
    $region8: #{tpu_custom_call.1} parent=1 // pred_region
      %30 = vsyncadd [#allocation6], 0
      %s31 = sshll.u32 %s1, 4
      %s32 = int_to_ptr.hbm [resolvable:$true] %s31
      %s33 = sshll.u32 [#allocation5], 4
      %s34 = int_to_ptr.vmem [resolvable:$true] %s33
      %39 = dma.hbm_to_vmem [thread:$0]  %s32, 16384, %s34, [#allocation6], 128, 128, 8
    $region9: #{tpu_custom_call.1} parent=1 // pred_fallthru
      _
    // Predicated region
    $region10: #{tpu_custom_call.1} parent=1 // pred_check
      _
    $region11: #{tpu_custom_call.1} parent=1 // pred_check_branch
      %41 = sbr.rel (0) target = $region13
    $region12: #{tpu_custom_call.1} parent=1 // pred_region
      %43 = vsyncadd [#allocation6], 0
      %s45 = sshll.u32 %s2, 4
      %s46 = int_to_ptr.hbm [resolvable:$true] %s45
      %s47 = sshll.u32 [#allocation7], 4
      %s48 = int_to_ptr.vmem [resolvable:$true] %s47
      %50 = dma.hbm_to_vmem [thread:$0]  %s46, 64, %s48, [#allocation6]
    $region13: #{tpu_custom_call.1} parent=1 // pred_fallthru
      _
    // Predicated region
    $region14: #{tpu_custom_call.1} parent=1 // pred_check
      _
    $region15: #{tpu_custom_call.1} parent=1 // pred_check_branch
      %52 = sbr.rel (0) target = $region17
    $region16: #{tpu_custom_call.1} parent=1 // pred_region
      %54 = vsyncadd [#allocation9], 0
      %s55 = sshll.u32 %s3, 4
      %s56 = int_to_ptr.hbm [resolvable:$true] %s55
      %s57 = sshll.u32 [#allocation8], 4
      %s58 = int_to_ptr.vmem [resolvable:$true] %s57
      %63 = dma.hbm_to_vmem [thread:$0]  %s56, 2048, %s58, [#allocation9], 128, 128, 8
    $region17: #{tpu_custom_call.1} parent=1 // pred_fallthru
      _
    // Predicated region
    $region18: #{tpu_custom_call.1} parent=1 // pred_check
      _
    $region19: #{tpu_custom_call.1} parent=1 // pred_check_branch
      %65 = sbr.rel (0) target = $region21
    $region20: #{tpu_custom_call.1} parent=1 // pred_region
      %67 = vsyncadd [#allocation9], 0
      %s68 = sshll.u32 %s4, 4
      %s69 = int_to_ptr.hbm [resolvable:$true] %s68
      %s70 = sshll.u32 [#allocation10], 4
      %s71 = int_to_ptr.vmem [resolvable:$true] %s70
      %76 = dma.hbm_to_vmem [thread:$0]  %s69, 2048, %s71, [#allocation9], 128, 128, 8
    $region21: #{tpu_custom_call.1} parent=1 // pred_fallthru
      _
    // Predicated region
    $region22: #{tpu_custom_call.1} parent=1 // pred_check
      _
    $region23: #{tpu_custom_call.1} parent=1 // pred_check_branch
      %78 = sbr.rel (0) target = $region25
    $region24: #{tpu_custom_call.1} parent=1 // pred_region
      %80 = vsyncadd [#allocation12], 0
      %s81 = sshll.u32 %s5, 4
      %s82 = int_to_ptr.hbm [resolvable:$true] %s81
      %s83 = sshll.u32 [#allocation11], 4
      %s84 = int_to_ptr.vmem [resolvable:$true] %s83
      %89 = dma.hbm_to_vmem [thread:$0]  %s82, 2048, %s84, [#allocation12], 128, 128, 8
    $region25: #{tpu_custom_call.1} parent=1 // pred_fallthru
      _
    // Predicated region
    $region26: #{tpu_custom_call.1} parent=1 // pred_check
      _
    $region27: #{tpu_custom_call.1} parent=1 // pred_check_branch
      %91 = sbr.rel (0) target = $region29
    $region28: #{tpu_custom_call.1} parent=1 // pred_region
      %93 = dma.done [#allocation3], 1024
    $region29: #{tpu_custom_call.1} parent=1 // pred_fallthru
      _
    // Predicated region
    $region30: #{tpu_custom_call.1} parent=1 // pred_check
      _
    $region31: #{tpu_custom_call.1} parent=1 // pred_check_branch
      %95 = sbr.rel (0) target = $region33
    $region32: #{tpu_custom_call.1} parent=1 // pred_region
      %97 = dma.done [#allocation6], 16384
    $region33: #{tpu_custom_call.1} parent=1 // pred_fallthru
      _
    // Predicated region
    $region34: #{tpu_custom_call.1} parent=1 // pred_check
      _
    $region35: #{tpu_custom_call.1} parent=1 // pred_check_branch
      %99 = sbr.rel (0) target = $region37
    $region36: #{tpu_custom_call.1} parent=1 // pred_region
      %101 = dma.done [#allocation6], 64
    $region37: #{tpu_custom_call.1} parent=1 // pred_fallthru
      _
    // Predicated region
    $region38: #{tpu_custom_call.1} parent=1 // pred_check
      _
    $region39: #{tpu_custom_call.1} parent=1 // pred_check_branch
      %103 = sbr.rel (0) target = $region41
    $region40: #{tpu_custom_call.1} parent=1 // pred_region
      %105 = dma.done [#allocation9], 2048
    $region41: #{tpu_custom_call.1} parent=1 // pred_fallthru
      _
    // Predicated region
    $region42: #{tpu_custom_call.1} parent=1 // pred_check
      _
    $region43: #{tpu_custom_call.1} parent=1 // pred_check_branch
      %107 = sbr.rel (0) target = $region45
    $region44: #{tpu_custom_call.1} parent=1 // pred_region
      %109 = dma.done [#allocation9], 2048
    $region45: #{tpu_custom_call.1} parent=1 // pred_fallthru
      _
    // Predicated region
    $region46: #{tpu_custom_call.1} parent=1 // pred_check
      _
    $region47: #{tpu_custom_call.1} parent=1 // pred_check_branch
      %111 = sbr.rel (0) target = $region49
    $region48: #{tpu_custom_call.1} parent=1 // pred_region
      %113 = dma.done [#allocation12], 2048
    $region49: #{tpu_custom_call.1} parent=1 // pred_fallthru
      _
    %v114 = vld [vmem:[#allocation2] sm:$0xff]
    %v115 = vld [vmem:[#allocation2 + $0x8] sm:$0xff]
    %v116 = vld [vmem:[#allocation2 + $0x10] sm:$0xff]
    %v117 = vld [vmem:[#allocation2 + $0x18] sm:$0xff]
    %v118 = vld [vmem:[#allocation2 + $0x20] sm:$0xff]
    %v119 = vld [vmem:[#allocation2 + $0x28] sm:$0xff]
    %v120 = vld [vmem:[#allocation2 + $0x30] sm:$0xff]
    %v121 = vld [vmem:[#allocation2 + $0x38] sm:$0xff]
    %v122 = vld [vmem:[#allocation5] sm:$0xff]
    %v123 = vld [vmem:[#allocation5 + $0x8] sm:$0xff]
    %v124 = vld [vmem:[#allocation5 + $0x10] sm:$0xff]
    %v125 = vld [vmem:[#allocation5 + $0x18] sm:$0xff]
    %v126 = vld [vmem:[#allocation5 + $0x20] sm:$0xff]
    %v127 = vld [vmem:[#allocation5 + $0x28] sm:$0xff]
    %v128 = vld [vmem:[#allocation5 + $0x30] sm:$0xff]
    %v129 = vld [vmem:[#allocation5 + $0x38] sm:$0xff]
    %v130 = vld [vmem:[#allocation5 + $0x40] sm:$0xff]
    %v131 = vld [vmem:[#allocation5 + $0x48] sm:$0xff]
    %v132 = vld [vmem:[#allocation5 + $0x50] sm:$0xff]
    %v133 = vld [vmem:[#allocation5 + $0x58] sm:$0xff]
    %v134 = vld [vmem:[#allocation5 + $0x60] sm:$0xff]
    %v135 = vld [vmem:[#allocation5 + $0x68] sm:$0xff]
    %v136 = vld [vmem:[#allocation5 + $0x70] sm:$0xff]
    %v137 = vld [vmem:[#allocation5 + $0x78] sm:$0xff]
    %v138 = vld [vmem:[#allocation5 + $0x80] sm:$0xff]
    %v139 = vld [vmem:[#allocation5 + $0x88] sm:$0xff]
    %v140 = vld [vmem:[#allocation5 + $0x90] sm:$0xff]
    %v141 = vld [vmem:[#allocation5 + $0x98] sm:$0xff]
    %v142 = vld [vmem:[#allocation5 + $0xa0] sm:$0xff]
    %v143 = vld [vmem:[#allocation5 + $0xa8] sm:$0xff]
    %v144 = vld [vmem:[#allocation5 + $0xb0] sm:$0xff]
    %v145 = vld [vmem:[#allocation5 + $0xb8] sm:$0xff]
    %v146 = vld [vmem:[#allocation5 + $0xc0] sm:$0xff]
    %v147 = vld [vmem:[#allocation5 + $0xc8] sm:$0xff]
    %v148 = vld [vmem:[#allocation5 + $0xd0] sm:$0xff]
    %v149 = vld [vmem:[#allocation5 + $0xd8] sm:$0xff]
    %v150 = vld [vmem:[#allocation5 + $0xe0] sm:$0xff]
    %v151 = vld [vmem:[#allocation5 + $0xe8] sm:$0xff]
    %v152 = vld [vmem:[#allocation5 + $0xf0] sm:$0xff]
    %v153 = vld [vmem:[#allocation5 + $0xf8] sm:$0xff]
    %v154 = vld [vmem:[#allocation5 + $0x100] sm:$0xff]
    %v155 = vld [vmem:[#allocation5 + $0x108] sm:$0xff]
    %v156 = vld [vmem:[#allocation5 + $0x110] sm:$0xff]
    %v157 = vld [vmem:[#allocation5 + $0x118] sm:$0xff]
    %v158 = vld [vmem:[#allocation5 + $0x120] sm:$0xff]
    %v159 = vld [vmem:[#allocation5 + $0x128] sm:$0xff]
    %v160 = vld [vmem:[#allocation5 + $0x130] sm:$0xff]
    %v161 = vld [vmem:[#allocation5 + $0x138] sm:$0xff]
    %v162 = vld [vmem:[#allocation5 + $0x140] sm:$0xff]
    %v163 = vld [vmem:[#allocation5 + $0x148] sm:$0xff]
    %v164 = vld [vmem:[#allocation5 + $0x150] sm:$0xff]
    %v165 = vld [vmem:[#allocation5 + $0x158] sm:$0xff]
    %v166 = vld [vmem:[#allocation5 + $0x160] sm:$0xff]
    %v167 = vld [vmem:[#allocation5 + $0x168] sm:$0xff]
    %v168 = vld [vmem:[#allocation5 + $0x170] sm:$0xff]
    %v169 = vld [vmem:[#allocation5 + $0x178] sm:$0xff]
    %v170 = vld [vmem:[#allocation5 + $0x180] sm:$0xff]
    %v171 = vld [vmem:[#allocation5 + $0x188] sm:$0xff]
    %v172 = vld [vmem:[#allocation5 + $0x190] sm:$0xff]
    %v173 = vld [vmem:[#allocation5 + $0x198] sm:$0xff]
    %v174 = vld [vmem:[#allocation5 + $0x1a0] sm:$0xff]
    %v175 = vld [vmem:[#allocation5 + $0x1a8] sm:$0xff]
    %v176 = vld [vmem:[#allocation5 + $0x1b0] sm:$0xff]
    %v177 = vld [vmem:[#allocation5 + $0x1b8] sm:$0xff]
    %v178 = vld [vmem:[#allocation5 + $0x1c0] sm:$0xff]
    %v179 = vld [vmem:[#allocation5 + $0x1c8] sm:$0xff]
    %v180 = vld [vmem:[#allocation5 + $0x1d0] sm:$0xff]
    %v181 = vld [vmem:[#allocation5 + $0x1d8] sm:$0xff]
    %v182 = vld [vmem:[#allocation5 + $0x1e0] sm:$0xff]
    %v183 = vld [vmem:[#allocation5 + $0x1e8] sm:$0xff]
    %v184 = vld [vmem:[#allocation5 + $0x1f0] sm:$0xff]
    %v185 = vld [vmem:[#allocation5 + $0x1f8] sm:$0xff]
    %v186 = vld [vmem:[#allocation5 + $0x200] sm:$0xff]
    %v187 = vld [vmem:[#allocation5 + $0x208] sm:$0xff]
    %v188 = vld [vmem:[#allocation5 + $0x210] sm:$0xff]
    %v189 = vld [vmem:[#allocation5 + $0x218] sm:$0xff]
    %v190 = vld [vmem:[#allocation5 + $0x220] sm:$0xff]
    %v191 = vld [vmem:[#allocation5 + $0x228] sm:$0xff]
    %v192 = vld [vmem:[#allocation5 + $0x230] sm:$0xff]
    %v193 = vld [vmem:[#allocation5 + $0x238] sm:$0xff]
    %v194 = vld [vmem:[#allocation5 + $0x240] sm:$0xff]
    %v195 = vld [vmem:[#allocation5 + $0x248] sm:$0xff]
    %v196 = vld [vmem:[#allocation5 + $0x250] sm:$0xff]
    %v197 = vld [vmem:[#allocation5 + $0x258] sm:$0xff]
    %v198 = vld [vmem:[#allocation5 + $0x260] sm:$0xff]
    %v199 = vld [vmem:[#allocation5 + $0x268] sm:$0xff]
    %v200 = vld [vmem:[#allocation5 + $0x270] sm:$0xff]
    %v201 = vld [vmem:[#allocation5 + $0x278] sm:$0xff]
    %v202 = vld [vmem:[#allocation5 + $0x280] sm:$0xff]
    %v203 = vld [vmem:[#allocation5 + $0x288] sm:$0xff]
    %v204 = vld [vmem:[#allocation5 + $0x290] sm:$0xff]
    %v205 = vld [vmem:[#allocation5 + $0x298] sm:$0xff]
    %v206 = vld [vmem:[#allocation5 + $0x2a0] sm:$0xff]
    %v207 = vld [vmem:[#allocation5 + $0x2a8] sm:$0xff]
    %v208 = vld [vmem:[#allocation5 + $0x2b0] sm:$0xff]
    %v209 = vld [vmem:[#allocation5 + $0x2b8] sm:$0xff]
    %v210 = vld [vmem:[#allocation5 + $0x2c0] sm:$0xff]
    %v211 = vld [vmem:[#allocation5 + $0x2c8] sm:$0xff]
    %v212 = vld [vmem:[#allocation5 + $0x2d0] sm:$0xff]
    %v213 = vld [vmem:[#allocation5 + $0x2d8] sm:$0xff]
    %v214 = vld [vmem:[#allocation5 + $0x2e0] sm:$0xff]
    %v215 = vld [vmem:[#allocation5 + $0x2e8] sm:$0xff]
    %v216 = vld [vmem:[#allocation5 + $0x2f0] sm:$0xff]
    %v217 = vld [vmem:[#allocation5 + $0x2f8] sm:$0xff]
    %v218 = vld [vmem:[#allocation5 + $0x300] sm:$0xff]
    %v219 = vld [vmem:[#allocation5 + $0x308] sm:$0xff]
    %v220 = vld [vmem:[#allocation5 + $0x310] sm:$0xff]
    %v221 = vld [vmem:[#allocation5 + $0x318] sm:$0xff]
    %v222 = vld [vmem:[#allocation5 + $0x320] sm:$0xff]
    %v223 = vld [vmem:[#allocation5 + $0x328] sm:$0xff]
    %v224 = vld [vmem:[#allocation5 + $0x330] sm:$0xff]
    %v225 = vld [vmem:[#allocation5 + $0x338] sm:$0xff]
    %v226 = vld [vmem:[#allocation5 + $0x340] sm:$0xff]
    %v227 = vld [vmem:[#allocation5 + $0x348] sm:$0xff]
    %v228 = vld [vmem:[#allocation5 + $0x350] sm:$0xff]
    %v229 = vld [vmem:[#allocation5 + $0x358] sm:$0xff]
    %v230 = vld [vmem:[#allocation5 + $0x360] sm:$0xff]
    %v231 = vld [vmem:[#allocation5 + $0x368] sm:$0xff]
    %v232 = vld [vmem:[#allocation5 + $0x370] sm:$0xff]
    %v233 = vld [vmem:[#allocation5 + $0x378] sm:$0xff]
    %v234 = vld [vmem:[#allocation5 + $0x380] sm:$0xff]
    %v235 = vld [vmem:[#allocation5 + $0x388] sm:$0xff]
    %v236 = vld [vmem:[#allocation5 + $0x390] sm:$0xff]
    %v237 = vld [vmem:[#allocation5 + $0x398] sm:$0xff]
    %v238 = vld [vmem:[#allocation5 + $0x3a0] sm:$0xff]
    %v239 = vld [vmem:[#allocation5 + $0x3a8] sm:$0xff]
    %v240 = vld [vmem:[#allocation5 + $0x3b0] sm:$0xff]
    %v241 = vld [vmem:[#allocation5 + $0x3b8] sm:$0xff]
    %v242 = vld [vmem:[#allocation5 + $0x3c0] sm:$0xff]
    %v243 = vld [vmem:[#allocation5 + $0x3c8] sm:$0xff]
    %v244 = vld [vmem:[#allocation5 + $0x3d0] sm:$0xff]
    %v245 = vld [vmem:[#allocation5 + $0x3d8] sm:$0xff]
    %v246 = vld [vmem:[#allocation5 + $0x3e0] sm:$0xff]
    %v247 = vld [vmem:[#allocation5 + $0x3e8] sm:$0xff]
    %v248 = vld [vmem:[#allocation5 + $0x3f0] sm:$0xff]
    %v249 = vld [vmem:[#allocation5 + $0x3f8] sm:$0xff]
    %v250 = vld [vmem:[#allocation7] sm:$0x1]
    %v252 = vperm.slane %v250, 0
    %254 = vmatpush.msra.mxu0 %v137
    %255 = vmatpush.msra.mxu0 %v136
    %256 = vmatpush.msra.mxu0 %v135
    %257 = vmatpush.msra.mxu0 %v134
    %258 = vmatpush.msra.mxu0 %v133
    %259 = vmatpush.msra.mxu0 %v132
    %260 = vmatpush.msra.mxu0 %v131
    %261 = vmatpush.msra.mxu0 %v130
    %262 = vmatpush.msra.mxu0 %v129
    %263 = vmatpush.msra.mxu0 %v128
    %264 = vmatpush.msra.mxu0 %v127
    %265 = vmatpush.msra.mxu0 %v126
    %266 = vmatpush.msra.mxu0 %v125
    %267 = vmatpush.msra.mxu0 %v124
    %268 = vmatpush.msra.mxu0 %v123
    %269 = vmatpush.msra.mxu0 %v122
    %270 = vmatmul.f32.gmra.mxu0 %v114
    %v271 = vpop.f32.mrf.mxu0
    %v272 = vadd.f32 %v252, %v271
    %273 = vdwg.mxu0
    %274 = vmatpush.msra.mxu0 %v153
    %275 = vmatpush.msra.mxu0 %v152
    %276 = vmatpush.msra.mxu0 %v151
    %277 = vmatpush.msra.mxu0 %v150
    %278 = vmatpush.msra.mxu0 %v149
    %279 = vmatpush.msra.mxu0 %v148
    %280 = vmatpush.msra.mxu0 %v147
    %281 = vmatpush.msra.mxu0 %v146
    %282 = vmatpush.msra.mxu0 %v145
    %283 = vmatpush.msra.mxu0 %v144
    %284 = vmatpush.msra.mxu0 %v143
    %285 = vmatpush.msra.mxu0 %v142
    %286 = vmatpush.msra.mxu0 %v141
    %287 = vmatpush.msra.mxu0 %v140
    %288 = vmatpush.msra.mxu0 %v139
    %289 = vmatpush.msra.mxu0 %v138
    %290 = vmatmul.f32.gmra.mxu0 %v115
    %v291 = vpop.f32.mrf.mxu0
    %v292 = vadd.f32 %v272, %v291
    %293 = vdwg.mxu0
    %294 = vmatpush.msra.mxu0 %v169
    %295 = vmatpush.msra.mxu0 %v168
    %296 = vmatpush.msra.mxu0 %v167
    %297 = vmatpush.msra.mxu0 %v166
    %298 = vmatpush.msra.mxu0 %v165
    %299 = vmatpush.msra.mxu0 %v164
    %300 = vmatpush.msra.mxu0 %v163
    %301 = vmatpush.msra.mxu0 %v162
    %302 = vmatpush.msra.mxu0 %v161
    %303 = vmatpush.msra.mxu0 %v160
    %304 = vmatpush.msra.mxu0 %v159
    %305 = vmatpush.msra.mxu0 %v158
    %306 = vmatpush.msra.mxu0 %v157
    %307 = vmatpush.msra.mxu0 %v156
    %308 = vmatpush.msra.mxu0 %v155
    %309 = vmatpush.msra.mxu0 %v154
    %310 = vmatmul.f32.gmra.mxu0 %v116
    %v311 = vpop.f32.mrf.mxu0
    %v312 = vadd.f32 %v292, %v311
    %313 = vdwg.mxu0
    %314 = vmatpush.msra.mxu0 %v185
    %315 = vmatpush.msra.mxu0 %v184
    %316 = vmatpush.msra.mxu0 %v183
    %317 = vmatpush.msra.mxu0 %v182
    %318 = vmatpush.msra.mxu0 %v181
    %319 = vmatpush.msra.mxu0 %v180
    %320 = vmatpush.msra.mxu0 %v179
    %321 = vmatpush.msra.mxu0 %v178
    %322 = vmatpush.msra.mxu0 %v177
    %323 = vmatpush.msra.mxu0 %v176
    %324 = vmatpush.msra.mxu0 %v175
    %325 = vmatpush.msra.mxu0 %v174
    %326 = vmatpush.msra.mxu0 %v173
    %327 = vmatpush.msra.mxu0 %v172
    %328 = vmatpush.msra.mxu0 %v171
    %329 = vmatpush.msra.mxu0 %v170
    %330 = vmatmul.f32.gmra.mxu0 %v117
    %v331 = vpop.f32.mrf.mxu0
    %v332 = vadd.f32 %v312, %v331
    %333 = vdwg.mxu0
    %334 = vmatpush.msra.mxu0 %v201
    %335 = vmatpush.msra.mxu0 %v200
    %336 = vmatpush.msra.mxu0 %v199
    %337 = vmatpush.msra.mxu0 %v198
    %338 = vmatpush.msra.mxu0 %v197
    %339 = vmatpush.msra.mxu0 %v196
    %340 = vmatpush.msra.mxu0 %v195
    %341 = vmatpush.msra.mxu0 %v194
    %342 = vmatpush.msra.mxu0 %v193
    %343 = vmatpush.msra.mxu0 %v192
    %344 = vmatpush.msra.mxu0 %v191
    %345 = vmatpush.msra.mxu0 %v190
    %346 = vmatpush.msra.mxu0 %v189
    %347 = vmatpush.msra.mxu0 %v188
    %348 = vmatpush.msra.mxu0 %v187
    %349 = vmatpush.msra.mxu0 %v186
    %350 = vmatmul.f32.gmra.mxu0 %v118
    %v351 = vpop.f32.mrf.mxu0
    %v352 = vadd.f32 %v332, %v351
    %353 = vdwg.mxu0
    %354 = vmatpush.msra.mxu0 %v217
    %355 = vmatpush.msra.mxu0 %v216
    %356 = vmatpush.msra.mxu0 %v215
    %357 = vmatpush.msra.mxu0 %v214
    %358 = vmatpush.msra.mxu0 %v213
    %359 = vmatpush.msra.mxu0 %v212
    %360 = vmatpush.msra.mxu0 %v211
    %361 = vmatpush.msra.mxu0 %v210
    %362 = vmatpush.msra.mxu0 %v209
    %363 = vmatpush.msra.mxu0 %v208
    %364 = vmatpush.msra.mxu0 %v207
    %365 = vmatpush.msra.mxu0 %v206
    %366 = vmatpush.msra.mxu0 %v205
    %367 = vmatpush.msra.mxu0 %v204
    %368 = vmatpush.msra.mxu0 %v203
    %369 = vmatpush.msra.mxu0 %v202
    %370 = vmatmul.f32.gmra.mxu0 %v119
    %v371 = vpop.f32.mrf.mxu0
    %v372 = vadd.f32 %v352, %v371
    %373 = vdwg.mxu0
    %374 = vmatpush.msra.mxu0 %v233
    %375 = vmatpush.msra.mxu0 %v232
    %376 = vmatpush.msra.mxu0 %v231
    %377 = vmatpush.msra.mxu0 %v230
    %378 = vmatpush.msra.mxu0 %v229
    %379 = vmatpush.msra.mxu0 %v228
    %380 = vmatpush.msra.mxu0 %v227
    %381 = vmatpush.msra.mxu0 %v226
    %382 = vmatpush.msra.mxu0 %v225
    %383 = vmatpush.msra.mxu0 %v224
    %384 = vmatpush.msra.mxu0 %v223
    %385 = vmatpush.msra.mxu0 %v222
    %386 = vmatpush.msra.mxu0 %v221
    %387 = vmatpush.msra.mxu0 %v220
    %388 = vmatpush.msra.mxu0 %v219
    %389 = vmatpush.msra.mxu0 %v218
    %390 = vmatmul.f32.gmra.mxu0 %v120
    %v391 = vpop.f32.mrf.mxu0
    %v392 = vadd.f32 %v372, %v391
    %393 = vdwg.mxu0
    %394 = vmatpush.msra.mxu0 %v249
    %395 = vmatpush.msra.mxu0 %v248
    %396 = vmatpush.msra.mxu0 %v247
    %397 = vmatpush.msra.mxu0 %v246
    %398 = vmatpush.msra.mxu0 %v245
    %399 = vmatpush.msra.mxu0 %v244
    %400 = vmatpush.msra.mxu0 %v243
    %401 = vmatpush.msra.mxu0 %v242
    %402 = vmatpush.msra.mxu0 %v241
    %403 = vmatpush.msra.mxu0 %v240
    %404 = vmatpush.msra.mxu0 %v239
    %405 = vmatpush.msra.mxu0 %v238
    %406 = vmatpush.msra.mxu0 %v237
    %407 = vmatpush.msra.mxu0 %v236
    %408 = vmatpush.msra.mxu0 %v235
    %409 = vmatpush.msra.mxu0 %v234
    %410 = vmatmul.f32.gmra.mxu0 %v121
    %v411 = vpop.f32.mrf.mxu0
    %v412 = vadd.f32 %v392, %v411
    %413 = vdwg.mxu0
    %v414 = vand.u32 2147483647, %v412
    %vm415 = vcmp.le.f32.partialorder %v414, 0.7853982
    %vm416 = vcmp.lt.s32.totalorder %v412, 0
    %v417 = vand.u32 %v412, 2139095040
    %v418 = vshrl.u32 %v417, 23
    %v419 = vsub.s32 %v418, 127
    %v420 = vand.u32 2147483647, %v412
    %v421 = vand.u32 %v420, 8388607
    %v422 = vor.u32 %v421, 8388608
    %v423 = vsub.s32 0, %v422
    %v424 = vadd.s32 %v419, 1
    %vm425 = vcmp.gt.s32.totalorder %v424, 0
    %v426 = vsel %vm425, %v424, 0
    %v427 = vshrl.u32 %v426, 5
    %v428 = vand.u32 %v426, 31
    %v429 = vsub.s32 32, %v428
    %v430 = vshrl.u32 683565275, %v429
    %v431 = vshll.u32 683565275, %v428
    %v432 = vshrl.u32 2475754826, %v429
    %v433 = vor.u32 %v431, %v432
    %v434 = vshll.u32 2475754826, %v428
    %v435 = vshrl.u32 2131351028, %v429
    %v436 = vor.u32 %v434, %v435
    %v437 = vshll.u32 2131351028, %v428
    %v438 = vshrl.u32 2102212464, %v429
    %v439 = vor.u32 %v437, %v438
    %v440 = vshll.u32 2102212464, %v428
    %v441 = vshrl.u32 920167782, %v429
    %v442 = vor.u32 %v440, %v441
    %v443 = vshll.u32 920167782, %v428
    %v444 = vshrl.u32 1326507024, %v429
    %v445 = vor.u32 %v443, %v444
    %vm446 = vcmp.lt.s32.totalorder %v427, 1
    %vm447 = vcmp.lt.s32.totalorder %v427, 2
    %vm448 = vcmp.lt.s32.totalorder %v427, 3
    %vm449 = vcmp.lt.s32.totalorder %v427, 4
    %v450 = vsel %vm446, %v430, %v433
    %v451 = vsel %vm449, %v439, 2102212464
    %v452 = vsel %vm448, %v436, %v451
    %v453 = vsel %vm447, %v450, %v452
    %v454 = vsel %vm446, %v433, %v436
    %v455 = vsel %vm449, %v442, 920167782
    %v456 = vsel %vm448, %v439, %v455
    %v457 = vsel %vm447, %v454, %v456
    %v458 = vsel %vm446, %v436, %v439
    %v459 = vsel %vm449, %v445, 1326507024
    %v460 = vsel %vm448, %v442, %v459
    %v461 = vsel %vm447, %v458, %v460
    %v462 = vshll.u32 %v422, 8
    %v463 = vand.u32 %v462, 65535
    %v464 = vshrl.u32 %v462, 16
    %v465 = vand.u32 %v461, 65535
    %v466 = vshrl.u32 %v461, 16
    %v467 = vmul.u32 %v463, %v465
    %v468 = vmul.u32 %v463, %v466
    %v469 = vmul.u32 %v464, %v465
    %v470 = vmul.u32 %v464, %v466
    %v471 = vshll.u32 %v468, 16
    %v472 = vshrl.u32 %v468, 16
    %v473 = vshll.u32 %v469, 16
    %v474 = vshrl.u32 %v469, 16
    %vm475 = vc.u32 %v467, %v471
    %v476 = vsel %vm475, 1, 0
    %v477 = vadd.s32 %v467, %v471
    %v478 = vadd.s32 %v470, %v476
    %vm479 = vc.u32 %v477, %v473
    %v480 = vsel %vm479, 1, 0
    %v481 = vadd.s32 %v477, %v473
    %v482 = vadd.s32 %v478, %v480
    %v483 = vadd.s32 %v482, %v472
    %v484 = vadd.s32 %v483, %v474
    %v485 = vand.u32 %v462, 65535
    %v486 = vshrl.u32 %v462, 16
    %v487 = vand.u32 %v457, 65535
    %v488 = vshrl.u32 %v457, 16
    %v489 = vmul.u32 %v485, %v487
    %v490 = vmul.u32 %v485, %v488
    %v491 = vmul.u32 %v486, %v487
    %v492 = vmul.u32 %v486, %v488
    %v493 = vshll.u32 %v490, 16
    %v494 = vshrl.u32 %v490, 16
    %v495 = vshll.u32 %v491, 16
    %v496 = vshrl.u32 %v491, 16
    %vm497 = vc.u32 %v489, %v493
    %v498 = vsel %vm497, 1, 0
    %v499 = vadd.s32 %v489, %v493
    %v500 = vadd.s32 %v492, %v498
    %vm501 = vc.u32 %v499, %v495
    %v502 = vsel %vm501, 1, 0
    %v503 = vadd.s32 %v499, %v495
    %v504 = vadd.s32 %v500, %v502
    %v505 = vadd.s32 %v504, %v494
    %v506 = vadd.s32 %v505, %v496
    %v507 = vmul.u32 %v462, %v453
    %v508 = vadd.s32 %v484, %v503
    %vm509 = vc.u32 %v484, %v503
    %v510 = vadd.s32 %v506, 1
    %v511 = vsel %vm509, %v510, %v506
    %v512 = vadd.s32 %v507, %v511
    %v513 = vadd.s32 %v512, 536870912
    %v514 = vshrl.u32 %v513, 30
    %v515 = vshll.u32 %v514, 30
    %v516 = vsub.s32 %v512, %v515
    %vm517 = vcmp.lt.s32.totalorder %v516, 0
    %v518 = vsub.s32 0, %v516
    %v519 = vsel %vm517, %v518, %v516
    %v520 = vclz %v519
    %v521 = vsub.s32 %v520, 2
    %vm522 = vcmp.gt.s32.totalorder 0, %v521
    %v523 = vsel %vm522, 0, %v521
    %v524 = vsub.s32 32, %v523
    %v525 = vshll.u32 %v516, %v523
    %v526 = vshrl.u32 %v508, %v524
    %v527 = vor.u32 %v525, %v526
    %v528 = vsub.s32 4294967266, %v523
    %v529 = vadd.s32 %v528, 127
    %v530 = vshll.u32 %v529, 23
    %v531 = vor.u32 4788187, %v530
    %v532 = vand.u32 2147483647, %v531
    %v534 = vcvt.s32.f32 %v527
    %v535 = vmul.f32 %v534, %v532
    %v536 = vxor.u32 %v535, 2147483648
    %v537 = vsel %vm416, %v536, %v535
    %v538 = vsub.s32 4, %v514
    %v539 = vsel %vm416, %v538, %v514
    %v540 = vsel %vm415, %v412, %v537
    %v541 = vsel %vm415, 0, %v539
    %v542 = vmul.f32 %v540, %v540
    %v543 = vmul.f32 %v542, -0.001358992
    %v544 = vadd.f32 %v543, 0.041655596
    %v545 = vmul.f32 %v542, %v544
    %v546 = vadd.f32 %v545, -0.4999988
    %v547 = vmul.f32 %v542, %v546
    %v548 = vadd.f32 1.0, %v547
    %v549 = vmul.f32 %v540, %v540
    %v550 = vmul.f32 %v549, -0.00019511016
    %v551 = vadd.f32 %v550, 0.008332121
    %v552 = vmul.f32 %v549, %v551
    %v553 = vadd.f32 %v552, -0.16666654
    %v554 = vmul.f32 %v549, %v553
    %v555 = vadd.f32 %v554, 1.0
    %v556 = vmul.f32 %v555, %v540
    %vm557 = vweird.f32 %v412
    %v558 = vand.u32 %v541, 3
    %vm559 = vcmp.lt.s32.totalorder %v558, 2
    %vm560 = vcmp.eq.s32.totalorder %v558, 0
    %v561 = vxor.u32 %v556, 2147483648
    %v562 = vsel %vm560, %v548, %v561
    %vm563 = vcmp.eq.s32.totalorder %v558, 2
    %v564 = vxor.u32 %v548, 2147483648
    %v565 = vsel %vm563, %v564, %v556
    %v566 = vsel %vm559, %v562, %v565
    %v567 = vsel %vm557, nan, %v566
    %v568 = vld [vmem:[#allocation8] sm:$0xff]
    %v569 = vld [vmem:[#allocation8 + $0x8] sm:$0xff]
    %v570 = vld [vmem:[#allocation8 + $0x10] sm:$0xff]
    %v571 = vld [vmem:[#allocation8 + $0x18] sm:$0xff]
    %v572 = vld [vmem:[#allocation8 + $0x20] sm:$0xff]
    %v573 = vld [vmem:[#allocation8 + $0x28] sm:$0xff]
    %v574 = vld [vmem:[#allocation8 + $0x30] sm:$0xff]
    %v575 = vld [vmem:[#allocation8 + $0x38] sm:$0xff]
    %v576 = vld [vmem:[#allocation8 + $0x40] sm:$0xff]
    %v577 = vld [vmem:[#allocation8 + $0x48] sm:$0xff]
    %v578 = vld [vmem:[#allocation8 + $0x50] sm:$0xff]
    %v579 = vld [vmem:[#allocation8 + $0x58] sm:$0xff]
    %v580 = vld [vmem:[#allocation8 + $0x60] sm:$0xff]
    %v581 = vld [vmem:[#allocation8 + $0x68] sm:$0xff]
    %v582 = vld [vmem:[#allocation8 + $0x70] sm:$0xff]
    %v583 = vld [vmem:[#allocation8 + $0x78] sm:$0xff]
    %v584 = vld [vmem:[#allocation7 + $0x1] sm:$0x1]
    %v586 = vperm.slane %v584, 0
    %588 = vmatpush.msra.mxu0 %v583
    %589 = vmatpush.msra.mxu0 %v582
    %590 = vmatpush.msra.mxu0 %v581
    %591 = vmatpush.msra.mxu0 %v580
    %592 = vmatpush.msra.mxu0 %v579
    %593 = vmatpush.msra.mxu0 %v578
    %594 = vmatpush.msra.mxu0 %v577
    %595 = vmatpush.msra.mxu0 %v576
    %596 = vmatpush.msra.mxu0 %v575
    %597 = vmatpush.msra.mxu0 %v574
    %598 = vmatpush.msra.mxu0 %v573
    %599 = vmatpush.msra.mxu0 %v572
    %600 = vmatpush.msra.mxu0 %v571
    %601 = vmatpush.msra.mxu0 %v570
    %602 = vmatpush.msra.mxu0 %v569
    %603 = vmatpush.msra.mxu0 %v568
    %604 = vmatmul.f32.gmra.mxu0 %v567
    %v605 = vpop.f32.mrf.mxu0
    %v606 = vadd.f32 %v586, %v605
    %607 = vdwg.mxu0
    %v608 = vtanh.pop %v606
    %v609 = vld [vmem:[#allocation10] sm:$0xff]
    %v610 = vld [vmem:[#allocation10 + $0x8] sm:$0xff]
    %v611 = vld [vmem:[#allocation10 + $0x10] sm:$0xff]
    %v612 = vld [vmem:[#allocation10 + $0x18] sm:$0xff]
    %v613 = vld [vmem:[#allocation10 + $0x20] sm:$0xff]
    %v614 = vld [vmem:[#allocation10 + $0x28] sm:$0xff]
    %v615 = vld [vmem:[#allocation10 + $0x30] sm:$0xff]
    %v616 = vld [vmem:[#allocation10 + $0x38] sm:$0xff]
    %v617 = vld [vmem:[#allocation10 + $0x40] sm:$0xff]
    %v618 = vld [vmem:[#allocation10 + $0x48] sm:$0xff]
    %v619 = vld [vmem:[#allocation10 + $0x50] sm:$0xff]
    %v620 = vld [vmem:[#allocation10 + $0x58] sm:$0xff]
    %v621 = vld [vmem:[#allocation10 + $0x60] sm:$0xff]
    %v622 = vld [vmem:[#allocation10 + $0x68] sm:$0xff]
    %v623 = vld [vmem:[#allocation10 + $0x70] sm:$0xff]
    %v624 = vld [vmem:[#allocation10 + $0x78] sm:$0xff]
    %v625 = vld [vmem:[#allocation7 + $0x2] sm:$0x1]
    %v627 = vperm.slane %v625, 0
    %629 = vmatpush.msra.mxu0 %v624
    %630 = vmatpush.msra.mxu0 %v623
    %631 = vmatpush.msra.mxu0 %v622
    %632 = vmatpush.msra.mxu0 %v621
    %633 = vmatpush.msra.mxu0 %v620
    %634 = vmatpush.msra.mxu0 %v619
    %635 = vmatpush.msra.mxu0 %v618
    %636 = vmatpush.msra.mxu0 %v617
    %637 = vmatpush.msra.mxu0 %v616
    %638 = vmatpush.msra.mxu0 %v615
    %639 = vmatpush.msra.mxu0 %v614
    %640 = vmatpush.msra.mxu0 %v613
    %641 = vmatpush.msra.mxu0 %v612
    %642 = vmatpush.msra.mxu0 %v611
    %643 = vmatpush.msra.mxu0 %v610
    %644 = vmatpush.msra.mxu0 %v609
    %645 = vmatmul.f32.gmra.mxu0 %v608
    %v646 = vpop.f32.mrf.mxu0
    %v647 = vadd.f32 %v627, %v646
    %648 = vdwg.mxu0
    %v649 = vtanh.pop %v647
    %v650 = vld [vmem:[#allocation11] sm:$0xff]
    %v651 = vld [vmem:[#allocation11 + $0x8] sm:$0xff]
    %v652 = vld [vmem:[#allocation11 + $0x10] sm:$0xff]
    %v653 = vld [vmem:[#allocation11 + $0x18] sm:$0xff]
    %v654 = vld [vmem:[#allocation11 + $0x20] sm:$0xff]
    %v655 = vld [vmem:[#allocation11 + $0x28] sm:$0xff]
    %v656 = vld [vmem:[#allocation11 + $0x30] sm:$0xff]
    %v657 = vld [vmem:[#allocation11 + $0x38] sm:$0xff]
    %v658 = vld [vmem:[#allocation11 + $0x40] sm:$0xff]
    %v659 = vld [vmem:[#allocation11 + $0x48] sm:$0xff]
    %v660 = vld [vmem:[#allocation11 + $0x50] sm:$0xff]
    %v661 = vld [vmem:[#allocation11 + $0x58] sm:$0xff]
    %v662 = vld [vmem:[#allocation11 + $0x60] sm:$0xff]
    %v663 = vld [vmem:[#allocation11 + $0x68] sm:$0xff]
    %v664 = vld [vmem:[#allocation11 + $0x70] sm:$0xff]
    %v665 = vld [vmem:[#allocation11 + $0x78] sm:$0xff]
    %v666 = vld [vmem:[#allocation7 + $0x3] sm:$0x1]
    %v668 = vperm.slane %v666, 0
    %670 = vmatpush.msra.mxu0 %v665
    %671 = vmatpush.msra.mxu0 %v664
    %672 = vmatpush.msra.mxu0 %v663
    %673 = vmatpush.msra.mxu0 %v662
    %674 = vmatpush.msra.mxu0 %v661
    %675 = vmatpush.msra.mxu0 %v660
    %676 = vmatpush.msra.mxu0 %v659
    %677 = vmatpush.msra.mxu0 %v658
    %678 = vmatpush.msra.mxu0 %v657
    %679 = vmatpush.msra.mxu0 %v656
    %680 = vmatpush.msra.mxu0 %v655
    %681 = vmatpush.msra.mxu0 %v654
    %682 = vmatpush.msra.mxu0 %v653
    %683 = vmatpush.msra.mxu0 %v652
    %684 = vmatpush.msra.mxu0 %v651
    %685 = vmatpush.msra.mxu0 %v650
    %686 = vmatmul.f32.gmra.mxu0 %v649
    %v687 = vpop.f32.mrf.mxu0
    %v688 = vadd.f32 %v668, %v687
    %689 = vdwg.mxu0
    %690 = vst [vmem:[#allocation13] sm:$0xff] %v688
    // Predicated region
    $region50: #{tpu_custom_call.1} parent=1 // pred_check
      _
    $region51: #{tpu_custom_call.1} parent=1 // pred_check_branch
      %692 = sbr.rel (0) target = $region53
    $region52: #{tpu_custom_call.1} parent=1 // pred_region
      %694 = vsyncadd [#allocation4], 0
      %s696 = sshll.u32 [#allocation13], 4
      %s697 = int_to_ptr.vmem [resolvable:$true] %s696
      %s698 = sshll.u32 %s6, 4
      %s699 = int_to_ptr.hbm [resolvable:$true] %s698
      %701 = dma.vmem_to_hbm [thread:$0]  %s697, 128, %s699, [#allocation4]
    $region53: #{tpu_custom_call.1} parent=1 // pred_fallthru
      _
    // Predicated region
    $region54: #{tpu_custom_call.1} parent=1 // pred_check
      _
    $region55: #{tpu_custom_call.1} parent=1 // pred_check_branch
      %703 = sbr.rel (0) target = $region57
    $region56: #{tpu_custom_call.1} parent=1 // pred_region
      %705 = dma.done [#allocation4], 128
    $region57: #{tpu_custom_call.1} parent=1 // pred_fallthru
      _
    %706 = vsyncpa [#allocation3], 1
    %707 = vsyncpa [#allocation6], 1
    %708 = vsyncpa [#allocation9], 1
    %709 = vsyncpa [#allocation12], 1
    %710 = vsyncpa [#allocation4], 1

</llo_original>
